<compile_context>
chip_gen: v5e
topology: v5e:2x2
jax: 0.10.0
libtpu: 0.0.40
codegen_flags: <defaults>
</compile_context>

<pallas_src>
import functools

import numpy as np
import jax
import jax.numpy as jnp
from jax.experimental import pallas as pl
from jax.experimental.pallas import tpu as pltpu

K = 8                                    # patch size fixed by the module
_TARGET_SLAB_BYTES = 2 * 1024 * 1024     # ~2 MiB per-step slab (perf review)
_VMEM_LIMIT_BYTES = 32 * 1024 * 1024     # safe on v5e/v6e/v7x


def _sublane_packing(dtype):
    """Elements packed per 32-bit sublane slot (1: f32, 2: bf16, 4: int8/fp8)."""
    return max(1, 4 // np.dtype(dtype).itemsize)


def _pick_rows_fast(hk, width, dtype, target_bytes):
    """Patch-rows per grid step: ~target_bytes output slab, legal block tiling."""
    itemsize = np.dtype(dtype).itemsize
    sub = K * _sublane_packing(dtype)              # sublane tile of input block
    want = max(1, target_bytes // (K * width * itemsize))
    if want >= hk:
        return hk                                  # whole image height per step
    rows = max(sub, (want // sub) * sub)           # multiple of sublane tile
    return hk if rows >= hk else rows


# ---------------------------------------------------------------------------
# Fast path: one whole-block relayout per grid step, dense 128-lane DMAs.
# ---------------------------------------------------------------------------
def _merge_kernel_fast(p_ref, o_ref, *, rows, wk):
    # p_ref: (rows, wk*64) lane-dense patch rows; p[t, j*64 + r*8 + c]
    # o_ref: (rows*8, wk*8) full-width image slab for these patch rows
    x = p_ref[...].reshape(rows, wk, K, K)         # [t, j, r, c]
    y = jnp.swapaxes(x, 1, 2)                      # [t, r, j, c]
    o_ref[...] = y.reshape(rows * K, wk * K)       # [(t,r), (j,c)] = image rows


@functools.partial(jax.jit, static_argnums=(1, 2, 3))
def _merge_fast(patches, height, width, target_bytes):
    b = patches.shape[0]
    hk, wk = height // K, width // K
    p = patches.reshape(b, hk, wk * K * K)         # free contiguous view
    rows = _pick_rows_fast(hk, width, patches.dtype, target_bytes)
    grid = (b, pl.cdiv(hk, rows))                  # partial last group allowed

    kernel = functools.partial(_merge_kernel_fast, rows=rows, wk=wk)
    return pl.pallas_call(
        kernel,
        out_shape=jax.ShapeDtypeStruct((b, height, width), patches.dtype),
        grid_spec=pltpu.PrefetchScalarGridSpec(
            num_scalar_prefetch=0,
            grid=grid,
            in_specs=[pl.BlockSpec((None, rows, wk * K * K),
                                   lambda n, i: (n, i, 0))],
            out_specs=pl.BlockSpec((None, rows * K, width),
                                   lambda n, i: (n, i, 0)),
        ),
        compiler_params=pltpu.CompilerParams(
            dimension_semantics=("parallel", "parallel"),
            vmem_limit_bytes=_VMEM_LIMIT_BYTES),
    )(p)


# ---------------------------------------------------------------------------
# Fallback: previously-validated per-patch sliced-store kernel.  Only used if
# the whole-block relayout above does not lower on the running Mosaic build.
# ---------------------------------------------------------------------------
def _merge_kernel_safe(p_ref, o_ref, *, rows, wk):
    # p_ref: (rows*wk, 8, 8) patches of this slab; o_ref: (rows*8, wk*8)
    for t in range(rows):
        for j in range(wk):
            o_ref[pl.ds(t * K, K), pl.ds(j * K, K)] = p_ref[t * wk + j]


def _pick_rows_safe(hk, wk, dtype, max_tiles=96):
    packing = _sublane_packing(dtype)
    rows = max(1, max_tiles // wk)                 # bound the unrolled stores
    rows = max(packing, (rows // packing) * packing)
    return min(rows, hk)


@functools.partial(jax.jit, static_argnums=(1, 2))
def _merge_safe(patches, height, width):
    b = patches.shape[0]
    hk, wk = height // K, width // K
    p = patches.reshape(b, hk * wk, K, K)
    rows = _pick_rows_safe(hk, wk, patches.dtype)
    grid = (b, pl.cdiv(hk, rows))

    kernel = functools.partial(_merge_kernel_safe, rows=rows, wk=wk)
    return pl.pallas_call(
        kernel,
        out_shape=jax.ShapeDtypeStruct((b, height, width), patches.dtype),
        grid_spec=pltpu.PrefetchScalarGridSpec(
            num_scalar_prefetch=0,
            grid=grid,
            in_specs=[pl.BlockSpec((None, rows * wk, K, K),
                                   lambda n, i: (n, i, 0, 0))],
            out_specs=pl.BlockSpec((None, rows * K, width),
                                   lambda n, i: (n, i, 0)),
        ),
        compiler_params=pltpu.CompilerParams(
            dimension_semantics=("parallel", "parallel"),
            vmem_limit_bytes=_VMEM_LIMIT_BYTES),
    )(p)


def block_merging(patches, height, width, target_block_bytes=_TARGET_SLAB_BYTES):
    """Pallas TPU implementation of block_merging.forward(patches, H, W)."""
    assert height % K == 0 and width % K == 0, (height, width)
    try:
        return jax.block_until_ready(
            _merge_fast(patches, height, width, target_block_bytes))
    except Exception:
        # TODO(synk): drop this fallback once whole-block reshape/swapaxes
        # relayouts are guaranteed to lower on all deployed Mosaic versions.
        return jax.block_until_ready(_merge_safe(patches, height, width))


def reference_block_merging(patches, height, width):
    """Plain-JAX reference mirroring the PyTorch module exactly."""
    b = patches.shape[0]
    x = patches.reshape(b, height // K, width // K, K, K)
    x = jnp.transpose(x, (0, 1, 3, 2, 4))
    return x.reshape(b, height, width)


if __name__ == "__main__":
    key = jax.random.PRNGKey(0)

    cases = [
        # (batch, H, W, dtype, target_block_bytes)
        (2, 16, 16, jnp.float32, _TARGET_SLAB_BYTES),   # 2x2 grid of 8x8 patches
        (2, 16, 32, jnp.float32, _TARGET_SLAB_BYTES),   # non-square, Hk != Wk
        (2, 24, 40, jnp.bfloat16, _TARGET_SLAB_BYTES),  # packed dtype, W % 128 != 0
        (1, 80, 64, jnp.float32, 4096),                 # multi-step grid + partial
                                                        # last row-group (cdiv path)
    ]

    for idx, (b, h, w, dtype, tgt) in enumerate(cases):
        key, sub = jax.random.split(key)
        patches = jax.random.normal(
            sub, (b, (h // K) * (w // K), K, K), jnp.float32).astype(dtype)
        out = block_merging(patches, h, w, tgt)
        ref = jax.block_until_ready(reference_block_merging(patches, h, w))
        assert out.shape == (b, h, w), (idx, out.shape)
        assert out.dtype == patches.dtype, (idx, out.dtype)
        assert jnp.array_equal(out, ref), (idx, "value mismatch vs reference")

    print("KERNEL_OK")
</pallas_src>

<mosaic_0001>
module attributes {stable_mosaic.version = 11 : i64} {
  func.func @_merge_kernel_fast(%arg0: i32, %arg1: i32, %arg2: memref<1x2x128xf32, #tpu.memory_space<vmem>>, %arg3: memref<1x16x16xf32, #tpu.memory_space<vmem>>) attributes {dimension_semantics = [#tpu.dimension_semantics<parallel>, #tpu.dimension_semantics<parallel>], iteration_bounds = array<i64: 2, 1>, scalar_prefetch = 0 : i64, scratch_operands = 0 : i64, tpu.core_type = #tpu.core_type<tc>, window_params = [{transform_indices = @transform_0, window_bounds = array<i64: 1, 2, 128>}, {transform_indices = @transform_1, window_bounds = array<i64: 1, 16, 16>}]} {
    %c0 = arith.constant 0 : index
    %c0_0 = arith.constant 0 : index
    %c0_1 = arith.constant 0 : index
    %0 = vector.load %arg2[%c0, %c0_0, %c0_1] : memref<1x2x128xf32, #tpu.memory_space<vmem>>, vector<1x2x128xf32>
    %1 = vector.shape_cast %0 : vector<1x2x128xf32> to vector<2x128xf32>
    %2 = vector.shape_cast %1 : vector<2x128xf32> to vector<2x2x8x8xf32>
    %3 = tpu.transpose %2, [0, 2, 1, 3] : vector<2x2x8x8xf32> -> vector<2x8x2x8xf32>
    %4 = vector.shape_cast %3 : vector<2x8x2x8xf32> to vector<16x16xf32>
    %c0_2 = arith.constant 0 : index
    %c0_3 = arith.constant 0 : index
    %c0_4 = arith.constant 0 : index
    %5 = vector.load %arg3[%c0_2, %c0_3, %c0_4] : memref<1x16x16xf32, #tpu.memory_space<vmem>>, vector<1x16x16xf32>
    %6 = vector.shape_cast %5 : vector<1x16x16xf32> to vector<16x16xf32>
    %7 = vector.shape_cast %4 : vector<16x16xf32> to vector<1x16x16xf32>
    tpu.vector_store %arg3[%c0_2, %c0_3, %c0_4], %7 {strides = array<i32>} : memref<1x16x16xf32, #tpu.memory_space<vmem>>, vector<1x16x16xf32>,
    return
  }
  func.func @transform_0(%arg0: i32, %arg1: i32) -> (i32, i32, i32) {
    %c0_i32 = arith.constant 0 : i32
    %c0_i32_0 = arith.constant 0 : i32
    return %arg0, %arg1, %c0_i32 : i32, i32, i32
  }
  func.func @transform_1(%arg0: i32, %arg1: i32) -> (i32, i32, i32) {
    %c0_i32 = arith.constant 0 : i32
    %c0_i32_0 = arith.constant 0 : i32
    return %arg0, %arg1, %c0_i32 : i32, i32, i32
  }
}

module attributes {stable_mosaic.version = 11 : i64} {
  func.func @_merge_kernel_safe(%arg0: i32, %arg1: i32, %arg2: memref<1x4x8x8xf32, #tpu.memory_space<vmem>>, %arg3: memref<1x16x16xf32, #tpu.memory_space<vmem>>) attributes {dimension_semantics = [#tpu.dimension_semantics<parallel>, #tpu.dimension_semantics<parallel>], iteration_bounds = array<i64: 2, 1>, scalar_prefetch = 0 : i64, scratch_operands = 0 : i64, tpu.core_type = #tpu.core_type<tc>, window_params = [{transform_indices = @transform_0, window_bounds = array<i64: 1, 4, 8, 8>}, {transform_indices = @transform_1, window_bounds = array<i64: 1, 16, 16>}]} {
    %c0 = arith.constant 0 : index
    %c0_0 = arith.constant 0 : index
    %c0_1 = arith.constant 0 : index
    %c0_2 = arith.constant 0 : index
    %0 = vector.load %arg2[%c0, %c0_0, %c0_1, %c0_2] : memref<1x4x8x8xf32, #tpu.memory_space<vmem>>, vector<1x1x8x8xf32>
    %1 = vector.shape_cast %0 : vector<1x1x8x8xf32> to vector<8x8xf32>
    %c0_3 = arith.constant 0 : index
    %c0_4 = arith.constant 0 : index
    %c0_5 = arith.constant 0 : index
    %2 = vector.load %arg3[%c0_3, %c0_4, %c0_5] : memref<1x16x16xf32, #tpu.memory_space<vmem>>, vector<1x8x8xf32>
    %3 = vector.shape_cast %2 : vector<1x8x8xf32> to vector<8x8xf32>
    %4 = vector.shape_cast %1 : vector<8x8xf32> to vector<1x8x8xf32>
    tpu.vector_store %arg3[%c0_3, %c0_4, %c0_5], %4 {strides = array<i32>} : memref<1x16x16xf32, #tpu.memory_space<vmem>>, vector<1x8x8xf32>,
    %c0_6 = arith.constant 0 : index
    %c1 = arith.constant 1 : index
    %c0_7 = arith.constant 0 : index
    %c0_8 = arith.constant 0 : index
    %5 = vector.load %arg2[%c0_6, %c1, %c0_7, %c0_8] : memref<1x4x8x8xf32, #tpu.memory_space<vmem>>, vector<1x1x8x8xf32>
    %6 = vector.shape_cast %5 : vector<1x1x8x8xf32> to vector<8x8xf32>
    %c0_9 = arith.constant 0 : index
    %c0_10 = arith.constant 0 : index
    %c8 = arith.constant 8 : index
    %7 = vector.load %arg3[%c0_9, %c0_10, %c8] : memref<1x16x16xf32, #tpu.memory_space<vmem>>, vector<1x8x8xf32>
    %8 = vector.shape_cast %7 : vector<1x8x8xf32> to vector<8x8xf32>
    %9 = vector.shape_cast %6 : vector<8x8xf32> to vector<1x8x8xf32>
    tpu.vector_store %arg3[%c0_9, %c0_10, %c8], %9 {strides = array<i32>} : memref<1x16x16xf32, #tpu.memory_space<vmem>>, vector<1x8x8xf32>,
    %c0_11 = arith.constant 0 : index
    %c2 = arith.constant 2 : index
    %c0_12 = arith.constant 0 : index
    %c0_13 = arith.constant 0 : index
    %10 = vector.load %arg2[%c0_11, %c2, %c0_12, %c0_13] : memref<1x4x8x8xf32, #tpu.memory_space<vmem>>, vector<1x1x8x8xf32>
    %11 = vector.shape_cast %10 : vector<1x1x8x8xf32> to vector<8x8xf32>
    %c0_14 = arith.constant 0 : index
    %c8_15 = arith.constant 8 : index
    %c0_16 = arith.constant 0 : index
    %12 = vector.load %arg3[%c0_14, %c8_15, %c0_16] : memref<1x16x16xf32, #tpu.memory_space<vmem>>, vector<1x8x8xf32>
    %13 = vector.shape_cast %12 : vector<1x8x8xf32> to vector<8x8xf32>
    %14 = vector.shape_cast %11 : vector<8x8xf32> to vector<1x8x8xf32>
    tpu.vector_store %arg3[%c0_14, %c8_15, %c0_16], %14 {strides = array<i32>} : memref<1x16x16xf32, #tpu.memory_space<vmem>>, vector<1x8x8xf32>,
    %c0_17 = arith.constant 0 : index
    %c3 = arith.constant 3 : index
    %c0_18 = arith.constant 0 : index
    %c0_19 = arith.constant 0 : index
    %15 = vector.load %arg2[%c0_17, %c3, %c0_18, %c0_19] : memref<1x4x8x8xf32, #tpu.memory_space<vmem>>, vector<1x1x8x8xf32>
    %16 = vector.shape_cast %15 : vector<1x1x8x8xf32> to vector<8x8xf32>
    %c0_20 = arith.constant 0 : index
    %c8_21 = arith.constant 8 : index
    %c8_22 = arith.constant 8 : index
    %17 = vector.load %arg3[%c0_20, %c8_21, %c8_22] : memref<1x16x16xf32, #tpu.memory_space<vmem>>, vector<1x8x8xf32>
    %18 = vector.shape_cast %17 : vector<1x8x8xf32> to vector<8x8xf32>
    %19 = vector.shape_cast %16 : vector<8x8xf32> to vector<1x8x8xf32>
    tpu.vector_store %arg3[%c0_20, %c8_21, %c8_22], %19 {strides = array<i32>} : memref<1x16x16xf32, #tpu.memory_space<vmem>>, vector<1x8x8xf32>,
    return
  }
  func.func @transform_0(%arg0: i32, %arg1: i32) -> (i32, i32, i32, i32) {
    %c0_i32 = arith.constant 0 : i32
    %c0_i32_0 = arith.constant 0 : i32
    %c0_i32_1 = arith.constant 0 : i32
    return %arg0, %arg1, %c0_i32, %c0_i32_0 : i32, i32, i32, i32
  }
  func.func @transform_1(%arg0: i32, %arg1: i32) -> (i32, i32, i32) {
    %c0_i32 = arith.constant 0 : i32
    %c0_i32_0 = arith.constant 0 : i32
    return %arg0, %arg1, %c0_i32 : i32, i32, i32
  }
}

</mosaic_0001>

<llo_original>
// kernel: _merge_safe.1
$region0: #{_merge_safe.1}
  #allocation0 [shape = 'u32[]', space=smem, size = 0x4, offset = 0x4, fixed_abs, tag = 'smem constant byte address 0x4 - core index']
  #allocation1 [shape = 'u32[72,128]{1,0:T(1,128)}', space=vmem, size = 0x9000, scoped, tag = 'internal scratch']
  %s0 = inlined_call_operand.hbm [shape: f32[2,4,8,8], index: 0, kind: input, shape index: {}]
  %s1 = inlined_call_operand.hbm [shape: f32[2,16,16], index: 1, kind: output, shape index: {}]
  %s2 = sld [smem:[#allocation0]]
  $region41: #{_merge_safe.1} parent=0
    _
  %s4 = ssub.s32 1, %s2
  %s5 = scalar_select 0, %s4, %s2
  $region1: #{_merge_safe.1} parent=0
    #allocation2 [shape = 'u8[32768]{0}', space=vmem, size = 0x8000, scoped, tag = 'input window, operand 0']
    #allocation3 [shape = 's32[2]{0}', space=sflag, size = 0x8, scoped, tag = 'scoped memory for _merge_safe.1']
    #allocation4 [shape = 's32[2]{0}', space=sflag, size = 0x8, scoped, tag = 'scoped memory for _merge_safe.1']
    #allocation5 [shape = 'u8[16384]{0}', space=vmem, size = 0x4000, scoped, tag = 'output window, operand 0']
    %6 = vsyncpa [#allocation3], 0
    %s7 = scalar_lea.sflag [#allocation3], 1
    %8 = vsyncpa %s7, 0
    %9 = vsyncpa [#allocation4], 0
    %s10 = scalar_lea.sflag [#allocation4], 1
    %11 = vsyncpa %s10, 0
    loop: start=0, step=1, limit=4
    $region2: #{_merge_safe.1} parent=1 // loop_pre_header
      _
    $region3: #{_merge_safe.1} parent=1 // loop_header
      %s13 = sphi 0, %s17
      %p14 = scmp.ge.s32.totalorder %s13, 4
      %s20 = sphi 0, %s32
      %s21 = sphi 0, %s28
      %s22 = sphi 0, %s20
      %s23 = sphi 0, %s21
      %s24 = sphi 0, %s22
      %s25 = sphi 0, %s23
      %s37 = sphi 0, %s39
      %s40 = sphi 0, %s37
      %s41 = sphi 0, %s40
      %s57 = sphi 0, %s41
      %s65 = sphi 0, %s67
      %s68 = sphi 0, %s65
      %s69 = sphi 0, %s68
      %s85 = sphi 0, %s69
    $region4: #{_merge_safe.1} parent=1 // loop_header_branch
      %16 = sbr.rel (%p14) target = $region8
    $region5: #{_merge_safe.1} parent=1 // loop_body
      %s18 = ssub.s32 %s13, 1
      %s19 = ssub.s32 %s13, 2
      %s26 = sadd.s32 1, %s21
      %p27 = scmp.ge.s32.totalorder %s26, 1
      %s28 = scalar_select %p27, 0, %s26
      %s29 = sadd.s32 1, %s20
      %s30 = scalar_select %p27, %s29, %s20
      %p31 = scmp.ge.s32.totalorder %s30, 2
      %s32 = scalar_select %p31, 0, %s30
      %s33 = ssub.s32 %s20, %s32
      %s34 = ssub.s32 %s21, %s28
      %s35 = sor.u32 %s33, %s34
      %p36 = scmp.eq.s32.totalorder %s35, 0
      %s38 = sadd.s32 %s37, 1
      %s39 = scalar_select %p36, %s37, %s38
      %p42 = pneg %p36
      %p43 = scmp.eq.s32.totalorder %s13, 1
      %p44 = por %p42, %p43
      %p45 = scmp.ne.s32.totalorder %s37, %s40
      %p46 = scmp.eq.s32.totalorder %s13, 0
      %p47 = por %p45, %p46
      %p48 = scmp.ne.s32.totalorder %s37, %s40
      %p49 = scmp.eq.s32.totalorder %s18, 1
      %p50 = por %p48, %p49
      %p51 = scmp.ne.s32.totalorder %s40, %s41
      %p52 = scmp.eq.s32.totalorder %s18, 0
      %p53 = por %p51, %p52
      %p54 = scmp.ne.s32.totalorder %s40, %s41
      %p55 = scmp.eq.s32.totalorder %s19, 1
      %p56 = por %p54, %p55
      %p58 = scmp.ne.s32.totalorder %s41, %s57
      %p59 = scmp.eq.s32.totalorder %s19, 0
      %p60 = por %p58, %p59
      %s61 = ssub.s32 %s20, %s32
      %s62 = ssub.s32 %s21, %s28
      %s63 = sor.u32 %s61, %s62
      %p64 = scmp.eq.s32.totalorder %s63, 0
      %s66 = sadd.s32 %s65, 1
      %s67 = scalar_select %p64, %s65, %s66
      %p70 = pneg %p64
      %p71 = scmp.eq.s32.totalorder %s13, 1
      %p72 = por %p70, %p71
      %p73 = scmp.ne.s32.totalorder %s65, %s68
      %p74 = scmp.eq.s32.totalorder %s13, 0
      %p75 = por %p73, %p74
      %p76 = scmp.ne.s32.totalorder %s65, %s68
      %p77 = scmp.eq.s32.totalorder %s18, 1
      %p78 = por %p76, %p77
      %p79 = scmp.ne.s32.totalorder %s68, %s69
      %p80 = scmp.eq.s32.totalorder %s18, 0
      %p81 = por %p79, %p80
      %p82 = scmp.ne.s32.totalorder %s68, %s69
      %p83 = scmp.eq.s32.totalorder %s19, 1
      %p84 = por %p82, %p83
      %p86 = scmp.ne.s32.totalorder %s69, %s85
      %p87 = scmp.eq.s32.totalorder %s19, 0
      %p88 = por %p86, %p87
      %p89 = scmp.le.s32.totalorder 1, %s13
      %p90 = scmp.lt.s32.totalorder %s13, 3
      %p91 = pnand %p89, %p90
      %p92 = pneg %p91
      // Predicated region
      $region9: #{_merge_safe.1} parent=5 // pred_check
        _
      $region10: #{_merge_safe.1} parent=5 // pred_check_branch
        %94 = sbr.rel (%p91) target = $region12
      $region11: #{_merge_safe.1} parent=5 // pred_region
        %s95 = ssub.s32 %s13, 1
      $region12: #{_merge_safe.1} parent=5 // pred_fallthru
        _
      %p96 = scmp.lt.s32.totalorder %s13, 2
      // Predicated region
      $region13: #{_merge_safe.1} parent=5 // pred_check
        %p97 = pneg %p96
      $region14: #{_merge_safe.1} parent=5 // pred_check_branch
        %99 = sbr.rel (%p97) target = $region16
      $region15: #{_merge_safe.1} parent=5 // pred_region
        // Predicated region
        $region17: #{_merge_safe.1} parent=15 // pred_check
          %p100 = pneg %p47
        $region18: #{_merge_safe.1} parent=15 // pred_check_branch
          %102 = sbr.rel (%p100) target = $region20
        $region19: #{_merge_safe.1} parent=15 // pred_region
          %s103 = sand.u32 %s37, 1
          %s104 = scalar_lea.sflag [#allocation3], %s103
          %s105 = sand.u32 %s37, 1
          %s106 = smul.addr %s105, 32
          %s107 = scalar_lea.vmem [#allocation2], %s106
          %s108 = smul.u32 4, %s21
          %110 = vsyncadd %s104, 0
          %s111 = smul.addr %s20, 4
          %s112 = sadd.s32 %s108, %s111
          %s113 = smul.addr %s112, 8
          %s114 = scalar_lea.hbm %s0, %s113
          %s115 = sshll.u32 %s114, 4
          %s116 = int_to_ptr.hbm [resolvable:$true] %s115
          %s117 = sshll.u32 %s107, 4
          %s118 = int_to_ptr.vmem [resolvable:$true] %s117
          %123 = dma.hbm_to_vmem [thread:$0]  %s116, 512, %s118, %s104, 128, 128, 8
        $region20: #{_merge_safe.1} parent=15 // pred_fallthru
          _
      $region16: #{_merge_safe.1} parent=5 // pred_fallthru
        _
      %p124 = scmp.le.s32.totalorder 1, %s13
      %p125 = scmp.lt.s32.totalorder %s13, 3
      %p126 = pnand %p124, %p125
      %p127 = pneg %p126
      // Predicated region
      $region21: #{_merge_safe.1} parent=5 // pred_check
        _
      $region22: #{_merge_safe.1} parent=5 // pred_check_branch
        %129 = sbr.rel (%p126) target = $region24
      $region23: #{_merge_safe.1} parent=5 // pred_region
        %s130 = ssub.s32 %s13, 1
        %s131 = sand.u32 %s40, 1
        %s132 = scalar_lea.sflag [#allocation3], %s131
        %s133 = sand.u32 %s40, 1
        %s134 = smul.addr %s133, 32
        %s135 = scalar_lea.vmem [#allocation2], %s134
        // Predicated region
        $region25: #{_merge_safe.1} parent=23 // pred_check
          %p136 = pneg %p53
        $region26: #{_merge_safe.1} parent=23 // pred_check_branch
          %138 = sbr.rel (%p136) target = $region28
        $region27: #{_merge_safe.1} parent=23 // pred_region
          %140 = dma.done %s132, 512
        $region28: #{_merge_safe.1} parent=23 // pred_fallthru
          _
        %s141 = sand.u32 %s40, 1
        %s142 = scalar_lea.sflag [#allocation3], %s141
        %s143 = sand.u32 %s40, 1
        %s144 = smul.addr %s143, 32
        %s145 = scalar_lea.vmem [#allocation2], %s144
        %p146 = pneg %p53
        %p147 = pneg %p50
        %p148 = pneg %p81
        %p149 = pneg %p78
        %s150 = sand.u32 %s68, 1
        %s151 = scalar_lea.sflag [#allocation4], %s150
        %s152 = sand.u32 %s68, 1
        %s153 = smul.addr %s152, 16
        %s154 = scalar_lea.vmem [#allocation5], %s153
        %s155 = smul.u32 4, %s23
        %s156 = smul.u32 2, %s23
        %v157 = vld [vmem:[%s135] sm:$0xff]
        %vm158 = vcmask 64512
        %159 = vst.msk [vmem:[%s154] sm:$0xff] %vm158, %v157
        %s160 = scalar_lea.vmem %s135, 8 [#allocation2]
        %v161 = vld [vmem:[%s160] sm:$0xff]
        %163 = vrot.lane.b32.xlu0 %v161, 8
        %v164 = vpop.permute.xlu0 %163
        %vm166 = vcmask 130112
        %167 = vst.msk [vmem:[%s154] sm:$0xff] %vm166, %v164
        %s168 = scalar_lea.vmem %s135, 16 [#allocation2]
        %v169 = vld [vmem:[%s168] sm:$0xff]
        %170 = vst.msk [vmem:[%s154 + $0x8] sm:$0xff] %vm158, %v169
        %s171 = scalar_lea.vmem %s135, 24 [#allocation2]
        %v172 = vld [vmem:[%s171] sm:$0xff]
        %174 = vrot.lane.b32.xlu0 %v172, 8
        %v175 = vpop.permute.xlu0 %174
        %177 = vst.msk [vmem:[%s154 + $0x8] sm:$0xff] %vm166, %v175
        %s178 = sand.u32 %s68, 1
        %s179 = scalar_lea.sflag [#allocation4], %s178
        %s180 = sand.u32 %s68, 1
        %s181 = smul.addr %s180, 16
        %s182 = scalar_lea.vmem [#allocation5], %s181
        // Predicated region
        $region29: #{_merge_safe.1} parent=23 // pred_check
          %p183 = pneg %p78
        $region30: #{_merge_safe.1} parent=23 // pred_check_branch
          %185 = sbr.rel (%p183) target = $region32
        $region31: #{_merge_safe.1} parent=23 // pred_region
          %s186 = smul.u32 2, %s23
          %188 = vsyncadd %s179, 0
          %s189 = smul.addr %s22, 2
          %s190 = sadd.s32 %s186, %s189
          %s191 = smul.addr %s190, 8
          %s192 = scalar_lea.hbm %s1, %s191
          %s193 = sshll.u32 %s182, 4
          %s194 = int_to_ptr.vmem [resolvable:$true] %s193
          %s195 = sshll.u32 %s192, 4
          %s196 = int_to_ptr.hbm [resolvable:$true] %s195
          %201 = dma.vmem_to_hbm [thread:$0]  %s194, 256, %s196, %s179, 128, 128, 8
        $region32: #{_merge_safe.1} parent=23 // pred_fallthru
          _
      $region24: #{_merge_safe.1} parent=5 // pred_fallthru
        _
      %p202 = scmp.le.s32.totalorder 2, %s13
      // Predicated region
      $region33: #{_merge_safe.1} parent=5 // pred_check
        %p203 = pneg %p202
      $region34: #{_merge_safe.1} parent=5 // pred_check_branch
        %205 = sbr.rel (%p203) target = $region36
      $region35: #{_merge_safe.1} parent=5 // pred_region
        %s206 = ssub.s32 %s13, 2
        // Predicated region
        $region37: #{_merge_safe.1} parent=35 // pred_check
          %p207 = pneg %p84
        $region38: #{_merge_safe.1} parent=35 // pred_check_branch
          %209 = sbr.rel (%p207) target = $region40
        $region39: #{_merge_safe.1} parent=35 // pred_region
          %s210 = sand.u32 %s69, 1
          %s211 = scalar_lea.sflag [#allocation4], %s210
          %s212 = sand.u32 %s69, 1
          %s213 = smul.addr %s212, 16
          %s214 = scalar_lea.vmem [#allocation5], %s213
          %216 = dma.done %s211, 256
        $region40: #{_merge_safe.1} parent=35 // pred_fallthru
          _
      $region36: #{_merge_safe.1} parent=5 // pred_fallthru
        _
    $region6: #{_merge_safe.1} parent=1 // loop_footer
      %s17 = sadd.s32 1, %s13
    $region7: #{_merge_safe.1} parent=1 // loop_footer_branch
      %12 = sbr.rel target = $region3
    $region8: #{_merge_safe.1} parent=1 // loop_exit
      _
    %217 = vsyncpa [#allocation3], 1
    %s218 = scalar_lea.sflag [#allocation3], 1
    %219 = vsyncpa %s218, 1
    %220 = vsyncpa [#allocation4], 1
    %s221 = scalar_lea.sflag [#allocation4], 1
    %222 = vsyncpa %s221, 1

</llo_original>
